<compile_context>
chip_gen: v5e
topology: v5e:2x2
jax: 0.10.0
libtpu: 0.0.40
codegen_flags: <defaults>
</compile_context>

<pallas_src>
import jax
import jax.numpy as jnp
from jax.experimental import pallas as pl
from jax.experimental.pallas import tpu as pltpu


def _jsd_partial_kernel(x_ref, out_ref):
    """One (N, TR, TC) tile -> a (1, 1, 8, TC) partial-sum block.

    All in-kernel reductions are over major (non-lane) axes, so they lower to
    pure VPU adds/maxes; the cross-lane reduction of the tiny partial tensor
    happens once in the JAX wrapper.
    """
    x = x_ref[...].astype(jnp.float32)               # (N, TR, TC)
    n = x.shape[0]
    log_n = jnp.log(jnp.float32(n))

    # Stable log-domain mean over dim 0.  Single full-size exp pass (EUP).
    m = jnp.max(x, axis=0)                           # (TR, TC)
    d = x - m[None]                                  # (N, TR, TC)
    e = jnp.exp(d)                                   # (N, TR, TC)
    s_e = jnp.sum(e, axis=0)                         # (TR, TC)
    s_ed = jnp.sum(e * d, axis=0)                    # (TR, TC)

    # sum_i exp(x_i)*(x_i - centroid)
    #   = exp(m) * (sum_i e_i*d_i - (log(sum_i e_i) - log N) * sum_i e_i)
    # (matches PyTorch KLDivLoss(log_target=True), including the intentional
    #  0 * -inf -> NaN behaviour for hard-zero probabilities, which shows up
    #  in e*d when x_i = -inf.)
    partial = jnp.exp(m) * (s_ed - (jnp.log(s_e) - log_n) * s_e)   # (TR, TC)

    # Fold sublane groups together: layout-no-op reshape + major-axis sum.
    tr, tc = partial.shape
    out_ref[...] = partial.reshape(tr // 8, 8, tc).sum(axis=0)[None, None]


def _vmem_capacity_bytes():
    """Physical VMEM of the attached TPU, with a generation-aware fallback."""
    try:
        cap = getattr(pltpu.get_tpu_info(), "vmem_capacity_bytes", None)
        if cap:
            return int(cap)
    except Exception:
        pass
    # Fallback: v7x has 64 MiB per TensorCore; v4/v5e/v6e have 128 MiB.
    try:
        kind = jax.devices()[0].device_kind.lower()
        if "7" in kind:
            return 64 * 1024 * 1024
        return 128 * 1024 * 1024
    except Exception:
        return 64 * 1024 * 1024


def _choose_tiles(n, rp, cp, granule, itemsize, vmem_limit, min_steps=4):
    """Exact-footprint tile selection.

    Live VMEM per grid step is modelled as
        2 * input_block          (BlockSpec double-buffering, input dtype)
      + n_temps * f32 block      (x->f32 copy, d, e, e*d inside the kernel)
      + 2 * output_block         (tiny, 8 x tile_c f32)
    and must stay inside the scoped VMEM limit with headroom.  Tiles are also
    capped so the grid has >= min_steps steps when the input is large enough
    (DMA/compute overlap + v7x two-TensorCore sharding of the parallel axes).
    """
    headroom = int(vmem_limit * 0.85)
    n_temps = 4 if itemsize == 4 else 5      # extra f32 copy for non-f32 inputs

    def footprint(tile_r, tile_c):
        in_blk = n * tile_r * tile_c * itemsize
        f32_blk = n * tile_r * tile_c * 4
        out_blk = 8 * tile_c * 4
        return 2 * in_blk + n_temps * f32_blk + 2 * out_blk

    # ---- lane tiling: prefer full C (most lane-dense); split into a divisor
    # multiple of 128 only when even one granule-row block of full C does not
    # fit the budget (cp is already padded to a multiple of 128).
    tile_c = cp
    if cp > 128 and footprint(granule, cp) > headroom:
        lanes = cp // 128
        tile_c = 128
        for div in range(lanes - 1, 0, -1):
            if lanes % div == 0 and footprint(granule, 128 * div) <= headroom:
                tile_c = 128 * div
                break
    num_c = cp // tile_c

    # ---- row tiling: largest granule multiple that fits the budget, further
    # capped so num_r * num_c >= min_steps whenever possible.
    groups = rp // granule
    per_group = n * granule * tile_c * (2 * itemsize + n_temps * 4)
    fixed = 2 * 8 * tile_c * 4
    max_groups = max(1, (headroom - fixed) // per_group)

    steps_needed = max(1, pl.cdiv(min_steps, num_c))
    if groups >= steps_needed:
        desired = max(1, groups // steps_needed)
    else:
        desired = groups
    tile_groups = max(1, min(max_groups, desired, groups))
    return granule * tile_groups, tile_c


def jsd_loss(x):
    """x: (N, R, C) log-probabilities (f32 / bf16 / 8-bit). Returns scalar f32."""
    n, r, c = x.shape
    itemsize = jnp.dtype(x.dtype).itemsize
    # Packed-sublane granule: f32 -> 8 rows, bf16 -> 16, int8/fp8 -> 32.
    granule = {4: 8, 2: 16, 1: 32}.get(itemsize, 8)

    # Zero-padded rows/columns contribute exactly 0 to the loss: in a padded
    # row/column every component has log p = 0, so centroid == tensor[i] there.
    pad_c = (-c) % 128
    cp = c + pad_c
    rp = r + ((-r) % granule)

    vmem_cap = _vmem_capacity_bytes()
    # Raise the scoped-VMEM limit (defaults: 16 MiB v5e / 32 MiB v6e+v7x).
    vmem_limit = int(vmem_cap * 0.75)

    tile_r, tile_c = _choose_tiles(n, rp, cp, granule, itemsize, vmem_limit)
    num_r = pl.cdiv(rp, tile_r)
    num_c = cp // tile_c
    rp_full = num_r * tile_r                  # pad R up to a tile_r multiple

    if pad_c or rp_full != r:
        x = jnp.pad(x, ((0, 0), (0, rp_full - r), (0, pad_c)))

    in_bytes = n * rp_full * cp * itemsize
    out_bytes = num_r * num_c * 8 * tile_c * 4
    cost = pl.CostEstimate(
        flops=6 * n * rp_full * cp,
        transcendentals=n * rp_full * cp,
        bytes_accessed=in_bytes + out_bytes,
    )

    partials = pl.pallas_call(
        _jsd_partial_kernel,
        out_shape=jax.ShapeDtypeStruct((num_r, num_c, 8, tile_c), jnp.float32),
        grid_spec=pltpu.PrefetchScalarGridSpec(
            num_scalar_prefetch=0,
            grid=(num_r, num_c),
            in_specs=[pl.BlockSpec((n, tile_r, tile_c), lambda i, j: (0, i, j))],
            out_specs=pl.BlockSpec((1, 1, 8, tile_c), lambda i, j: (i, j, 0, 0)),
        ),
        compiler_params=pltpu.CompilerParams(
            # Each grid step writes its own output block -> both axes are
            # race-free "parallel" (v7x can shard steps across both TCs).
            dimension_semantics=("parallel", "parallel"),
            vmem_limit_bytes=vmem_limit,
        ),
        cost_estimate=cost,
    )(x)

    # Single tiny cross-lane reduction + the 1/N weight, once at the end.
    return jnp.sum(partials, dtype=jnp.float32) / jnp.float32(n)


def jsd_loss_ref(x):
    """Pure-JAX reference mirroring the PyTorch module."""
    x = x.astype(jnp.float32)
    n = x.shape[0]
    centroid = jax.nn.logsumexp(x, axis=0) - jnp.log(jnp.float32(n))
    return jnp.sum(jnp.exp(x) * (x - centroid[None])) / n


if __name__ == "__main__":
    key = jax.random.PRNGKey(0)
    N, R, C = 4, 16, 128
    logits = jax.random.normal(key, (N, R, C), dtype=jnp.float32)
    # log-probabilities over the last axis (what JSDLoss expects)
    x = jax.nn.log_softmax(logits, axis=-1)

    loss = jax.block_until_ready(jsd_loss(x))
    ref = jax.block_until_ready(jsd_loss_ref(x))

    assert jnp.allclose(loss, ref, rtol=1e-5, atol=1e-5), (loss, ref)
    print("KERNEL_OK")
</pallas_src>

<mosaic_0001>
module attributes {stable_mosaic.version = 11 : i64} {
  func.func @_jsd_partial_kernel(%arg0: i32, %arg1: i32, %arg2: memref<4x16x128xf32, #tpu.memory_space<vmem>>, %arg3: memref<1x1x8x128xf32, #tpu.memory_space<vmem>>) attributes {dimension_semantics = [#tpu.dimension_semantics<parallel>, #tpu.dimension_semantics<parallel>], iteration_bounds = array<i64: 1, 1>, scalar_prefetch = 0 : i64, scratch_operands = 0 : i64, tpu.core_type = #tpu.core_type<tc>, window_params = [{transform_indices = @transform_0, window_bounds = array<i64: 4, 16, 128>}, {transform_indices = @transform_1, window_bounds = array<i64: 1, 1, 8, 128>}]} {
    %c0 = arith.constant 0 : index
    %c0_0 = arith.constant 0 : index
    %c0_1 = arith.constant 0 : index
    %0 = vector.load %arg2[%c0, %c0_0, %c0_1] : memref<4x16x128xf32, #tpu.memory_space<vmem>>, vector<4x16x128xf32>
    %cst = arith.constant 4.000000e+00 : f32
    %1 = math.log %cst : f32
    %cst_2 = arith.constant dense<0xFF800000> : vector<16x128xf32>
    %2 = vector.multi_reduction <maximumf>, %0, %cst_2 [0] : vector<4x16x128xf32> to vector<16x128xf32>
    %3 = vector.shape_cast %2 : vector<16x128xf32> to vector<1x16x128xf32>
    %4 = vector.broadcast %3 : vector<1x16x128xf32> to vector<4x16x128xf32>
    %5 = arith.subf %0, %4 : vector<4x16x128xf32>
    %6 = math.exp %5 : vector<4x16x128xf32>
    %cst_3 = arith.constant dense<0.000000e+00> : vector<16x128xf32>
    %7 = vector.multi_reduction <add>, %6, %cst_3 [0] : vector<4x16x128xf32> to vector<16x128xf32>
    %8 = arith.mulf %6, %5 : vector<4x16x128xf32>
    %cst_4 = arith.constant dense<0.000000e+00> : vector<16x128xf32>
    %9 = vector.multi_reduction <add>, %8, %cst_4 [0] : vector<4x16x128xf32> to vector<16x128xf32>
    %10 = math.exp %2 : vector<16x128xf32>
    %11 = math.log %7 : vector<16x128xf32>
    %12 = vector.broadcast %1 : f32 to vector<16x128xf32>
    %13 = arith.subf %11, %12 : vector<16x128xf32>
    %14 = arith.mulf %13, %7 : vector<16x128xf32>
    %15 = arith.subf %9, %14 : vector<16x128xf32>
    %16 = arith.mulf %10, %15 : vector<16x128xf32>
    %17 = vector.shape_cast %16 : vector<16x128xf32> to vector<2x8x128xf32>
    %cst_5 = arith.constant dense<0.000000e+00> : vector<8x128xf32>
    %18 = vector.multi_reduction <add>, %17, %cst_5 [0] : vector<2x8x128xf32> to vector<8x128xf32>
    %19 = vector.shape_cast %18 : vector<8x128xf32> to vector<1x1x8x128xf32>
    %c0_6 = arith.constant 0 : index
    %c0_7 = arith.constant 0 : index
    %c0_8 = arith.constant 0 : index
    %c0_9 = arith.constant 0 : index
    %20 = vector.load %arg3[%c0_6, %c0_7, %c0_8, %c0_9] : memref<1x1x8x128xf32, #tpu.memory_space<vmem>>, vector<1x1x8x128xf32>
    tpu.vector_store %arg3[%c0_6, %c0_7, %c0_8, %c0_9], %19 {strides = array<i32>} : memref<1x1x8x128xf32, #tpu.memory_space<vmem>>, vector<1x1x8x128xf32>,
    return
  }
  func.func @transform_0(%arg0: i32, %arg1: i32) -> (i32, i32, i32) {
    %c0_i32 = arith.constant 0 : i32
    %c0_i32_0 = arith.constant 0 : i32
    return %c0_i32, %arg0, %arg1 : i32, i32, i32
  }
  func.func @transform_1(%arg0: i32, %arg1: i32) -> (i32, i32, i32, i32) {
    %c0_i32 = arith.constant 0 : i32
    %c0_i32_0 = arith.constant 0 : i32
    %c0_i32_1 = arith.constant 0 : i32
    return %arg0, %arg1, %c0_i32, %c0_i32_0 : i32, i32, i32, i32
  }
}

</mosaic_0001>

<llo_original>
// kernel: tpu_custom_call.1
$region0: #{tpu_custom_call.1}
  #allocation0 [shape = 'u32[]', space=smem, size = 0x4, offset = 0x4, fixed_abs, tag = 'smem constant byte address 0x4 - core index']
  #allocation1 [shape = 'u32[72,128]{1,0:T(1,128)}', space=vmem, size = 0x9000, scoped, tag = 'internal scratch']
  %s0 = inlined_call_operand.hbm [shape: f32[4,16,128], index: 0, kind: input, shape index: {}]
  %s1 = inlined_call_operand.hbm [shape: f32[1,1,8,128], index: 1, kind: output, shape index: {}]
  %s2 = sld [smem:[#allocation0]]
  $region18: #{tpu_custom_call.1} parent=0
    _
  %s4 = ssub.s32 1, %s2
  %s5 = scalar_select 0, %s4, %s2
  $region1: #{tpu_custom_call.1} parent=0
    #allocation2 [shape = 'u8[32768]{0}', space=vmem, size = 0x8000, scoped, tag = 'input window, operand 0, single buffered']
    #allocation3 [shape = 's32[1]{0}', space=sflag, size = 0x4, scoped, tag = 'scoped memory for tpu_custom_call.1']
    #allocation4 [shape = 's32[1]{0}', space=sflag, size = 0x4, scoped, tag = 'scoped memory for tpu_custom_call.1']
    #allocation5 [shape = 'u8[4096]{0}', space=vmem, size = 0x1000, scoped, tag = 'output window, operand 0, single buffered']
    %6 = vsyncpa [#allocation3], 0
    %7 = vsyncpa [#allocation4], 0
    // Predicated region
    $region2: #{tpu_custom_call.1} parent=1 // pred_check
      _
    $region3: #{tpu_custom_call.1} parent=1 // pred_check_branch
      %9 = sbr.rel (0) target = $region5
    $region4: #{tpu_custom_call.1} parent=1 // pred_region
      %11 = vsyncadd [#allocation3], 0
      %s12 = sshll.u32 %s0, 4
      %s13 = int_to_ptr.hbm [resolvable:$true] %s12
      %s14 = sshll.u32 [#allocation2], 4
      %s15 = int_to_ptr.vmem [resolvable:$true] %s14
      %20 = dma.hbm_to_vmem [thread:$0]  %s13, 1024, %s15, [#allocation3], 128, 128, 8
    $region5: #{tpu_custom_call.1} parent=1 // pred_fallthru
      _
    // Predicated region
    $region6: #{tpu_custom_call.1} parent=1 // pred_check
      _
    $region7: #{tpu_custom_call.1} parent=1 // pred_check_branch
      %22 = sbr.rel (0) target = $region9
    $region8: #{tpu_custom_call.1} parent=1 // pred_region
      %24 = dma.done [#allocation3], 1024
    $region9: #{tpu_custom_call.1} parent=1 // pred_fallthru
      _
    %v25 = vld [vmem:[#allocation2] sm:$0xff]
    %v26 = vld [vmem:[#allocation2 + $0x8] sm:$0xff]
    %v27 = vld [vmem:[#allocation2 + $0x10] sm:$0xff]
    %v28 = vld [vmem:[#allocation2 + $0x18] sm:$0xff]
    %v29 = vld [vmem:[#allocation2 + $0x20] sm:$0xff]
    %v30 = vld [vmem:[#allocation2 + $0x28] sm:$0xff]
    %v31 = vld [vmem:[#allocation2 + $0x30] sm:$0xff]
    %v32 = vld [vmem:[#allocation2 + $0x38] sm:$0xff]
    %v33 = vmax.f32 %v25, %v29
    %v34 = vmax.f32 %v27, %v31
    %v35 = vmax.f32 %v33, %v34
    %v36 = vmax.f32 %v26, %v30
    %v37 = vmax.f32 %v28, %v32
    %v38 = vmax.f32 %v36, %v37
    %v39 = vsub.f32 %v25, %v35
    %v40 = vsub.f32 %v26, %v38
    %v41 = vsub.f32 %v27, %v35
    %v42 = vsub.f32 %v28, %v38
    %v43 = vsub.f32 %v29, %v35
    %v44 = vsub.f32 %v30, %v38
    %v45 = vsub.f32 %v31, %v35
    %v46 = vsub.f32 %v32, %v38
    %v47 = vmul.f32 %v39, 1.442695
    %v48 = vpow.pop %v47
    %v49 = vmul.f32 %v40, 1.442695
    %v50 = vpow.pop %v49
    %v51 = vmul.f32 %v41, 1.442695
    %v52 = vpow.pop %v51
    %v53 = vmul.f32 %v42, 1.442695
    %v54 = vpow.pop %v53
    %v55 = vmul.f32 %v43, 1.442695
    %v56 = vpow.pop %v55
    %v57 = vmul.f32 %v44, 1.442695
    %v58 = vpow.pop %v57
    %v59 = vmul.f32 %v45, 1.442695
    %v60 = vpow.pop %v59
    %v61 = vmul.f32 %v46, 1.442695
    %v62 = vpow.pop %v61
    %v63 = vadd.f32 %v48, %v52
    %v64 = vadd.f32 %v63, %v56
    %v65 = vadd.f32 %v64, %v60
    %v66 = vadd.f32 %v50, %v54
    %v67 = vadd.f32 %v66, %v58
    %v68 = vadd.f32 %v67, %v62
    %v69 = vmul.f32 %v48, %v39
    %v70 = vmul.f32 %v50, %v40
    %v71 = vmul.f32 %v52, %v41
    %v72 = vmul.f32 %v54, %v42
    %v73 = vmul.f32 %v56, %v43
    %v74 = vmul.f32 %v58, %v44
    %v75 = vmul.f32 %v60, %v45
    %v76 = vmul.f32 %v62, %v46
    %v77 = vadd.f32 %v69, %v71
    %v78 = vadd.f32 %v77, %v73
    %v79 = vadd.f32 %v78, %v75
    %v80 = vadd.f32 %v70, %v72
    %v81 = vadd.f32 %v80, %v74
    %v82 = vadd.f32 %v81, %v76
    %v83 = vmul.f32 %v35, 1.442695
    %v84 = vpow.pop %v83
    %v85 = vmul.f32 %v38, 1.442695
    %v86 = vpow.pop %v85
    %v87 = vlog2.pop %v65
    %v88 = vmul.f32 %v87, 0.6931472
    %v89 = vlog2.pop %v68
    %v90 = vmul.f32 %v89, 0.6931472
    %v91 = vsub.f32 %v88, 1.3862944
    %v92 = vsub.f32 %v90, 1.3862944
    %v93 = vmul.f32 %v91, %v65
    %v94 = vmul.f32 %v92, %v68
    %v95 = vsub.f32 %v79, %v93
    %v96 = vsub.f32 %v82, %v94
    %v97 = vmul.f32 %v84, %v95
    %v98 = vmul.f32 %v86, %v96
    %v99 = vadd.f32 %v97, %v98
    %100 = vst [vmem:[#allocation5] sm:$0xff] %v99
    // Predicated region
    $region10: #{tpu_custom_call.1} parent=1 // pred_check
      _
    $region11: #{tpu_custom_call.1} parent=1 // pred_check_branch
      %102 = sbr.rel (0) target = $region13
    $region12: #{tpu_custom_call.1} parent=1 // pred_region
      %104 = vsyncadd [#allocation4], 0
      %s106 = sshll.u32 [#allocation5], 4
      %s107 = int_to_ptr.vmem [resolvable:$true] %s106
      %s108 = sshll.u32 %s1, 4
      %s109 = int_to_ptr.hbm [resolvable:$true] %s108
      %111 = dma.vmem_to_hbm [thread:$0]  %s107, 128, %s109, [#allocation4]
    $region13: #{tpu_custom_call.1} parent=1 // pred_fallthru
      _
    // Predicated region
    $region14: #{tpu_custom_call.1} parent=1 // pred_check
      _
    $region15: #{tpu_custom_call.1} parent=1 // pred_check_branch
      %113 = sbr.rel (0) target = $region17
    $region16: #{tpu_custom_call.1} parent=1 // pred_region
      %115 = dma.done [#allocation4], 128
    $region17: #{tpu_custom_call.1} parent=1 // pred_fallthru
      _
    %116 = vsyncpa [#allocation3], 1
    %117 = vsyncpa [#allocation4], 1

</llo_original>
